<compile_context>
chip_gen: v5e
topology: v5e:2x2
jax: 0.10.0
libtpu: 0.0.40
codegen_flags: <defaults>
</compile_context>

<pallas_src>
import functools

import jax
import jax.numpy as jnp
from jax.experimental import pallas as pl
from jax.experimental.pallas import tpu as pltpu

LANE = 128       # lane quantum (last dim)
SUB = 16         # sublane quantum for bf16-packed rows
_NEG_INF = -1e30


def _round_up(x, m):
    return (x + m - 1) // m * m


def _mlp_kernel(layer_meta, x_ref, w_ref, b_ref, out_ref):
    """layer_meta: static tuple of (row_offset, in_dim, out_pad) per layer.

    x_ref:   (TILE_B, in0_pad)        bf16 activation tile (pipelined on batch)
    w_ref:   (slab_rows, max_out_pad) bf16 weight slab (VMEM-resident)
    b_ref:   (>=8, max_out_pad)       f32 bias slab (VMEM-resident; last layer's
                                      padded lanes hold -1e30 => softmax mask)
    out_ref: (TILE_B, out_pad_last)   f32 log-probabilities (lane-padded)
    """
    num_layers = len(layer_meta)
    h = x_ref[...]                                       # bf16, no f32 upcast
    logits = None
    for l, (off, in_d, out_p) in enumerate(layer_meta):
        w = w_ref[off:off + in_d, 0:out_p]               # static slice (cheap view)
        b = b_ref[l:l + 1, 0:out_p]                      # f32 (1, out_p)
        y = jnp.dot(h, w, preferred_element_type=jnp.float32) + b
        if l < num_layers - 1:
            # ReLU in f32; dropout == identity in eval mode.
            h = jnp.maximum(y, 0.0).astype(jnp.bfloat16)
        else:
            logits = y                                   # f32 (TILE_B, out_p)

    # Padded output lanes already carry a -1e30 bias, so a plain numerically
    # stable log_softmax is exact (exp underflows to 0 on padded lanes).
    m = jnp.max(logits, axis=1, keepdims=True)
    shifted = logits - m
    lse = jnp.log(jnp.sum(jnp.exp(shifted), axis=1, keepdims=True))
    out_ref[...] = (shifted - lse).astype(out_ref.dtype)


def _pack_params(params, input_size):
    """Build the aligned bf16 weight slab / f32 bias slab ONCE (not per call)."""
    num_layers = len(params)
    out_dims = [int(W.shape[0]) for (W, _) in params]
    out_pads = [_round_up(d, LANE) for d in out_dims]
    max_out = max(out_pads)

    in0_pad = _round_up(input_size, SUB)
    in_dims = [in0_pad] + out_pads[:-1]                  # contraction width per layer

    row_offsets, rows = [], 0
    for in_d in in_dims:
        row_offsets.append(rows)
        rows += _round_up(in_d, SUB)
    total_rows = _round_up(max(rows, SUB), SUB)

    w_slab = jnp.zeros((total_rows, max_out), jnp.bfloat16)
    b_slab = jnp.zeros((_round_up(num_layers, 8), max_out), jnp.float32)
    for l, (W, b) in enumerate(params):
        Wt = jnp.asarray(W, jnp.float32).T               # (true_in, out)
        ti, to = Wt.shape
        w_slab = w_slab.at[row_offsets[l]:row_offsets[l] + ti, 0:to].set(
            Wt.astype(jnp.bfloat16))
        b_slab = b_slab.at[l, 0:to].set(jnp.asarray(b, jnp.float32))

    # Bake the log-softmax lane mask into the LAST layer's padded bias lanes
    # only (hidden-layer padded lanes must stay 0 so padded activations stay 0).
    if out_pads[-1] > out_dims[-1]:
        b_slab = b_slab.at[num_layers - 1, out_dims[-1]:out_pads[-1]].set(_NEG_INF)

    layer_meta = tuple(
        (row_offsets[l], in_dims[l], out_pads[l]) for l in range(num_layers))
    return w_slab, b_slab, layer_meta, in0_pad, out_pads[-1], out_dims[-1]


def _target_grid_steps():
    """2 batch tiles on v7x (2 TensorCores/chip), 1 big tile on v5e/v6e."""
    try:
        kind = jax.devices()[0].device_kind.lower()
    except Exception:
        return 1
    return 2 if "7" in kind else 1


def make_network_forward(params, input_size):
    """Pack params once and return a jitted forward(x) using the Pallas kernel."""
    (w_slab, b_slab, layer_meta, in0_pad, out_pad, out_size) = _pack_params(
        params, input_size)
    kernel = functools.partial(_mlp_kernel, layer_meta)
    steps = _target_grid_steps()

    # VMEM cap for the double-buffered activation-in + output tiles (~24 MiB
    # budget keeps headroom under the 32 MiB scoped default on every chip).
    bytes_per_row = in0_pad * 2 + out_pad * 4
    max_tile_rows = max(SUB, ((24 << 20) // (2 * bytes_per_row)) // SUB * SUB)

    flops_per_row = 2 * sum(in_d * out_p for (_, in_d, out_p) in layer_meta)

    @jax.jit
    def forward(x):
        B, in_true = x.shape
        tile_b = min(_round_up(-(-_round_up(B, SUB) // steps), SUB), max_tile_rows)
        b_pad = _round_up(B, tile_b)
        grid = (b_pad // tile_b,)

        x_p = jnp.pad(x.astype(jnp.bfloat16),
                      ((0, b_pad - B), (0, in0_pad - in_true)))

        cost = pl.CostEstimate(
            flops=b_pad * flops_per_row,
            transcendentals=b_pad * out_pad,
            bytes_accessed=(b_pad * in0_pad * 2 + int(w_slab.size) * 2
                            + int(b_slab.size) * 4 + b_pad * out_pad * 4))

        res = pl.pallas_call(
            kernel,
            out_shape=jax.ShapeDtypeStruct((b_pad, out_pad), jnp.float32),
            grid=grid,
            in_specs=[
                pl.BlockSpec((tile_b, in0_pad), lambda i: (i, 0)),   # activations tile
                pl.BlockSpec(w_slab.shape, lambda i: (0, 0)),        # weights: VMEM-resident
                pl.BlockSpec(b_slab.shape, lambda i: (0, 0)),        # biases:  VMEM-resident
            ],
            out_specs=pl.BlockSpec((tile_b, out_pad), lambda i: (i, 0)),
            compiler_params=pltpu.CompilerParams(
                dimension_semantics=("parallel",),                   # megacore shard on v7x
            ),
            cost_estimate=cost,
        )(x_p, w_slab, b_slab)
        return res[:B, :out_size]

    return forward


def network_forward(x, params):
    """One-shot convenience wrapper (re-packs params; prefer make_network_forward)."""
    return make_network_forward(params, x.shape[1])(x)


def init_params(key, input_size, output_size, hidden_layers):
    """Deterministic init mimicking nn.Linear shapes: W:(out,in), b:(out,)."""
    sizes = [input_size] + list(hidden_layers) + [output_size]
    params = []
    for i in range(len(sizes) - 1):
        fan_in, fan_out = sizes[i], sizes[i + 1]
        key, kw, kb = jax.random.split(key, 3)
        bound = 1.0 / jnp.sqrt(fan_in)
        W = jax.random.uniform(kw, (fan_out, fan_in), jnp.float32, -bound, bound)
        b = jax.random.uniform(kb, (fan_out,), jnp.float32, -bound, bound)
        params.append((W, b))
    return params


def reference_forward_f32(x, params):
    """Pure-JAX f32 reference of the PyTorch forward (eval mode)."""
    h = jnp.asarray(x, jnp.float32)
    for (W, b) in params[:-1]:
        h = jnp.maximum(h @ W.T + b, 0.0)
    W, b = params[-1]
    return jax.nn.log_softmax(h @ W.T + b, axis=1)


def reference_forward_bf16(x, params):
    """Reference matching the kernel's precision policy (bf16 operands, f32 accum)."""
    h = jnp.asarray(x, jnp.bfloat16)
    for (W, b) in params[:-1]:
        y = jnp.dot(h, jnp.asarray(W, jnp.bfloat16).T,
                    preferred_element_type=jnp.float32) + jnp.asarray(b, jnp.float32)
        h = jnp.maximum(y, 0.0).astype(jnp.bfloat16)
    W, b = params[-1]
    logits = jnp.dot(h, jnp.asarray(W, jnp.bfloat16).T,
                     preferred_element_type=jnp.float32) + jnp.asarray(b, jnp.float32)
    return jax.nn.log_softmax(logits, axis=1)


if __name__ == "__main__":
    input_size = 32
    hidden_layers = [64, 48]
    output_size = 10
    batch = 2

    key = jax.random.PRNGKey(0)
    key, kx = jax.random.split(key)
    x = jax.random.normal(kx, (batch, input_size), jnp.float32)
    params = init_params(key, input_size, output_size, hidden_layers)

    # Pack weights/biases ONCE; reuse the jitted forward for every call.
    forward = make_network_forward(params, input_size)

    # Small (launch-bound) case.
    out = jax.block_until_ready(forward(x))
    assert out.shape == (batch, output_size)
    assert jnp.allclose(out, reference_forward_bf16(x, params), atol=1e-3, rtol=1e-3), \
        "mismatch vs bf16-precision reference"
    assert jnp.allclose(out, reference_forward_f32(x, params), atol=1e-1, rtol=1e-1), \
        "mismatch vs f32 reference"
    assert jnp.allclose(jnp.sum(jnp.exp(out), axis=1), 1.0, atol=1e-4)

    # Larger batch: one big tile on v5e/v6e, two 256-row tiles on v7x.
    key, kx2 = jax.random.split(key)
    x_big = jax.random.normal(kx2, (512, input_size), jnp.float32)
    out_big = jax.block_until_ready(forward(x_big))
    assert out_big.shape == (512, output_size)
    assert jnp.allclose(out_big, reference_forward_bf16(x_big, params),
                        atol=1e-3, rtol=1e-3), "mismatch vs reference (batched)"
    assert jnp.allclose(jnp.sum(jnp.exp(out_big), axis=1), 1.0, atol=1e-4)

    print("KERNEL_OK")
</pallas_src>

<mosaic_0001>
module attributes {stable_mosaic.version = 11 : i64} {
  func.func @_mlp_kernel(%arg0: i32, %arg1: memref<16x32xbf16, #tpu.memory_space<vmem>>, %arg2: memref<288x128xbf16, #tpu.memory_space<vmem>>, %arg3: memref<8x128xf32, #tpu.memory_space<vmem>>, %arg4: memref<16x128xf32, #tpu.memory_space<vmem>>) attributes {dimension_semantics = [#tpu.dimension_semantics<parallel>], iteration_bounds = array<i64: 1>, scalar_prefetch = 0 : i64, scratch_operands = 0 : i64, tpu.core_type = #tpu.core_type<tc>, window_params = [{transform_indices = @transform_0, window_bounds = array<i64: 16, 32>}, {pipeline_mode = #tpu.pipeline_mode<synchronous>, transform_indices = @transform_1, window_bounds = array<i64: 288, 128>}, {pipeline_mode = #tpu.pipeline_mode<synchronous>, transform_indices = @transform_2, window_bounds = array<i64: 8, 128>}, {transform_indices = @transform_3, window_bounds = array<i64: 16, 128>}]} {
    %c0 = arith.constant 0 : index
    %c0_0 = arith.constant 0 : index
    %0 = vector.load %arg1[%c0, %c0_0] : memref<16x32xbf16, #tpu.memory_space<vmem>>, vector<16x32xbf16>
    %c0_1 = arith.constant 0 : index
    %c0_2 = arith.constant 0 : index
    %1 = vector.load %arg2[%c0_1, %c0_2] : memref<288x128xbf16, #tpu.memory_space<vmem>>, vector<32x128xbf16>
    %c0_3 = arith.constant 0 : index
    %c0_4 = arith.constant 0 : index
    %2 = vector.load %arg3[%c0_3, %c0_4] : memref<8x128xf32, #tpu.memory_space<vmem>>, vector<1x128xf32>
    %cst = arith.constant dense<0.000000e+00> : vector<16x128xf32>
    %3 = tpu.matmul %0, %1, %cst {dimension_numbers = #tpu.dot_dimension_numbers<[1], [0], [0], [1], [0, 0, 1, 1], [], []>} : vector<16x32xbf16>, vector<32x128xbf16>, vector<16x128xf32> -> vector<16x128xf32>
    %4 = vector.broadcast %2 : vector<1x128xf32> to vector<16x128xf32>
    %5 = arith.addf %3, %4 : vector<16x128xf32>
    %cst_5 = arith.constant 0.000000e+00 : f32
    %6 = vector.broadcast %cst_5 : f32 to vector<16x128xf32>
    %7 = arith.maximumf %5, %6 : vector<16x128xf32>
    %8 = arith.truncf %7 : vector<16x128xf32> to vector<16x128xbf16>
    %c32 = arith.constant 32 : index
    %c0_6 = arith.constant 0 : index
    %9 = vector.load %arg2[%c32, %c0_6] : memref<288x128xbf16, #tpu.memory_space<vmem>>, vector<128x128xbf16>
    %c1 = arith.constant 1 : index
    %c0_7 = arith.constant 0 : index
    %10 = vector.load %arg3[%c1, %c0_7] : memref<8x128xf32, #tpu.memory_space<vmem>>, vector<1x128xf32>
    %cst_8 = arith.constant dense<0.000000e+00> : vector<16x128xf32>
    %11 = tpu.matmul %8, %9, %cst_8 {dimension_numbers = #tpu.dot_dimension_numbers<[1], [0], [0], [1], [0, 0, 1, 1], [], []>} : vector<16x128xbf16>, vector<128x128xbf16>, vector<16x128xf32> -> vector<16x128xf32>
    %12 = vector.broadcast %10 : vector<1x128xf32> to vector<16x128xf32>
    %13 = arith.addf %11, %12 : vector<16x128xf32>
    %cst_9 = arith.constant 0.000000e+00 : f32
    %14 = vector.broadcast %cst_9 : f32 to vector<16x128xf32>
    %15 = arith.maximumf %13, %14 : vector<16x128xf32>
    %16 = arith.truncf %15 : vector<16x128xf32> to vector<16x128xbf16>
    %c160 = arith.constant 160 : index
    %c0_10 = arith.constant 0 : index
    %17 = vector.load %arg2[%c160, %c0_10] : memref<288x128xbf16, #tpu.memory_space<vmem>>, vector<128x128xbf16>
    %c2 = arith.constant 2 : index
    %c0_11 = arith.constant 0 : index
    %18 = vector.load %arg3[%c2, %c0_11] : memref<8x128xf32, #tpu.memory_space<vmem>>, vector<1x128xf32>
    %cst_12 = arith.constant dense<0.000000e+00> : vector<16x128xf32>
    %19 = tpu.matmul %16, %17, %cst_12 {dimension_numbers = #tpu.dot_dimension_numbers<[1], [0], [0], [1], [0, 0, 1, 1], [], []>} : vector<16x128xbf16>, vector<128x128xbf16>, vector<16x128xf32> -> vector<16x128xf32>
    %20 = vector.broadcast %18 : vector<1x128xf32> to vector<16x128xf32>
    %21 = arith.addf %19, %20 : vector<16x128xf32>
    %cst_13 = arith.constant dense<0xFF800000> : vector<16xf32>
    %22 = vector.multi_reduction <maximumf>, %21, %cst_13 [1] : vector<16x128xf32> to vector<16xf32>
    %23 = vector.shape_cast %22 : vector<16xf32> to vector<16x1xf32>
    %24 = vector.broadcast %23 : vector<16x1xf32> to vector<16x128xf32>
    %25 = arith.subf %21, %24 : vector<16x128xf32>
    %26 = math.exp %25 : vector<16x128xf32>
    %cst_14 = arith.constant dense<0.000000e+00> : vector<16xf32>
    %27 = vector.multi_reduction <add>, %26, %cst_14 [1] : vector<16x128xf32> to vector<16xf32>
    %28 = vector.shape_cast %27 : vector<16xf32> to vector<16x1xf32>
    %29 = math.log %28 : vector<16x1xf32>
    %30 = vector.broadcast %29 : vector<16x1xf32> to vector<16x128xf32>
    %31 = arith.subf %25, %30 : vector<16x128xf32>
    %c0_15 = arith.constant 0 : index
    %c0_16 = arith.constant 0 : index
    %32 = vector.load %arg4[%c0_15, %c0_16] : memref<16x128xf32, #tpu.memory_space<vmem>>, vector<16x128xf32>
    tpu.vector_store %arg4[%c0_15, %c0_16], %31 {strides = array<i32>} : memref<16x128xf32, #tpu.memory_space<vmem>>, vector<16x128xf32>,
    return
  }
  func.func @transform_0(%arg0: i32) -> (i32, i32) {
    %c0_i32 = arith.constant 0 : i32
    %c0_i32_0 = arith.constant 0 : i32
    return %arg0, %c0_i32 : i32, i32
  }
  func.func @transform_1(%arg0: i32) -> (i32, i32) {
    %c0_i32 = arith.constant 0 : i32
    %c0_i32_0 = arith.constant 0 : i32
    %c0_i32_1 = arith.constant 0 : i32
    return %c0_i32, %c0_i32_0 : i32, i32
  }
  func.func @transform_2(%arg0: i32) -> (i32, i32) {
    %c0_i32 = arith.constant 0 : i32
    %c0_i32_0 = arith.constant 0 : i32
    %c0_i32_1 = arith.constant 0 : i32
    return %c0_i32, %c0_i32_0 : i32, i32
  }
  func.func @transform_3(%arg0: i32) -> (i32, i32) {
    %c0_i32 = arith.constant 0 : i32
    %c0_i32_0 = arith.constant 0 : i32
    return %arg0, %c0_i32 : i32, i32
  }
}

</mosaic_0001>

<llo_original>
// kernel: forward.1
$region0: #{forward.1}
  #allocation0 [shape = 'u32[]', space=smem, size = 0x4, offset = 0x4, fixed_abs, tag = 'smem constant byte address 0x4 - core index']
  #allocation1 [shape = 'u32[72,128]{1,0:T(1,128)}', space=vmem, size = 0x9000, scoped, tag = 'internal scratch']
  %s0 = inlined_call_operand.vmem [shape: bf16[16,32], index: 0, kind: input, shape index: {}]
  %s1 = inlined_call_operand.hbm [shape: bf16[288,128], index: 1, kind: input, shape index: {}]
  %s2 = inlined_call_operand.vmem [shape: f32[8,128], index: 2, kind: input, shape index: {}]
  %s3 = inlined_call_operand.vmem [shape: f32[16,128], index: 3, kind: output, shape index: {}]
  %s4 = sld [smem:[#allocation0]]
  $region26: #{forward.1} parent=0
    _
  %s6 = ssub.s32 1, %s4
  %s7 = scalar_select 0, %s6, %s4
  $region1: #{forward.1} parent=0
    #allocation2 [shape = 'u8[73728]{0}', space=vmem, size = 0x12000, scoped, tag = 'input window, operand 1, single buffered']
    #allocation3 [shape = 's32[1]{0}', space=sflag, size = 0x4, scoped, tag = 'scoped memory for forward.1']
    %8 = vsyncpa [#allocation3], 0
    // Predicated region
    $region2: #{forward.1} parent=1 // pred_check
      _
    $region3: #{forward.1} parent=1 // pred_check_branch
      %10 = sbr.rel (0) target = $region5
    $region4: #{forward.1} parent=1 // pred_region
      _
    $region5: #{forward.1} parent=1 // pred_fallthru
      _
    // Predicated region
    $region6: #{forward.1} parent=1 // pred_check
      _
    $region7: #{forward.1} parent=1 // pred_check_branch
      %12 = sbr.rel (0) target = $region9
    $region8: #{forward.1} parent=1 // pred_region
      %14 = vsyncadd [#allocation3], 0
      %s15 = sshll.u32 %s1, 4
      %s16 = int_to_ptr.hbm [resolvable:$true] %s15
      %s17 = sshll.u32 [#allocation2], 4
      %s18 = int_to_ptr.vmem [resolvable:$true] %s17
      %23 = dma.hbm_to_vmem [thread:$0]  %s16, 2304, %s18, [#allocation3], 64, 64, 4
    $region9: #{forward.1} parent=1 // pred_fallthru
      _
    // Predicated region
    $region10: #{forward.1} parent=1 // pred_check
      _
    $region11: #{forward.1} parent=1 // pred_check_branch
      %25 = sbr.rel (0) target = $region13
    $region12: #{forward.1} parent=1 // pred_region
      _
    $region13: #{forward.1} parent=1 // pred_fallthru
      _
    // Predicated region
    $region14: #{forward.1} parent=1 // pred_check
      _
    $region15: #{forward.1} parent=1 // pred_check_branch
      %27 = sbr.rel (0) target = $region17
    $region16: #{forward.1} parent=1 // pred_region
      %29 = dma.done [#allocation3], 2304
    $region17: #{forward.1} parent=1 // pred_fallthru
      _
    %v31 = vld [vmem:[%s0] sm:$0xf]
    %v32 = vld [vmem:[%s0 + $0x4] sm:$0xf]
    %v33 = vld [vmem:[#allocation2] sm:$0xf]
    %v34 = vld [vmem:[#allocation2 + $0x4] sm:$0xf]
    %v35 = vld [vmem:[#allocation2 + $0x8] sm:$0xf]
    %v36 = vld [vmem:[#allocation2 + $0xc] sm:$0xf]
    %v37 = vld [vmem:[%s2] sm:$0x1]
    %v38 = vperm.slane %v37, 0
    %v41 = vunpack.c.l.b16 %v31
    %v42 = vunpack.c.l.b16 %v32
    %v43 = vpack.c.b16 %v42, %v41
    %v48 = vunpack.c.l.b16 %v33
    %v49 = vunpack.c.l.b16 %v34
    %v50 = vunpack.c.l.b16 %v35
    %v51 = vunpack.c.l.b16 %v36
    %v52 = vpack.c.b16 %v49, %v48
    %v53 = vpack.c.b16 %v51, %v50
    %vm56 = vcmask 261120
    %v58 = vsel %vm56, %v43, 0
    %60 = vmatpush.bf16.msra.mxu0 0
    %61 = vmatpush.bf16.msra.mxu0 0
    %62 = vmatpush.bf16.msra.mxu0 0
    %63 = vmatpush.bf16.msra.mxu0 0
    %64 = vmatpush.bf16.msra.mxu0 0
    %65 = vmatpush.bf16.msra.mxu0 0
    %66 = vmatpush.bf16.msra.mxu0 %v53
    %67 = vmatpush.bf16.msra.mxu0 %v52
    %68 = vmatmul.bf16.gmra.mxu0 %v58
    %v69 = vpop.f32.mrf.mxu0
    %v70 = vadd.f32 %v38, %v69
    %v71 = vpop.f32.mrf.mxu0
    %v72 = vadd.f32 %v38, %v71
    %73 = vdwg.mxu0
    %v74 = vmax.f32 %v70, 0.0
    %v75 = vmax.f32 %v72, 0.0
    %v76 = vpack.c.bf16 %v75, %v74
    %v77 = vld [vmem:[#allocation2 + $0x10] sm:$0xf]
    %v78 = vld [vmem:[#allocation2 + $0x14] sm:$0xf]
    %v79 = vld [vmem:[#allocation2 + $0x18] sm:$0xf]
    %v80 = vld [vmem:[#allocation2 + $0x1c] sm:$0xf]
    %v81 = vld [vmem:[#allocation2 + $0x20] sm:$0xf]
    %v82 = vld [vmem:[#allocation2 + $0x24] sm:$0xf]
    %v83 = vld [vmem:[#allocation2 + $0x28] sm:$0xf]
    %v84 = vld [vmem:[#allocation2 + $0x2c] sm:$0xf]
    %v85 = vld [vmem:[#allocation2 + $0x30] sm:$0xf]
    %v86 = vld [vmem:[#allocation2 + $0x34] sm:$0xf]
    %v87 = vld [vmem:[#allocation2 + $0x38] sm:$0xf]
    %v88 = vld [vmem:[#allocation2 + $0x3c] sm:$0xf]
    %v89 = vld [vmem:[#allocation2 + $0x40] sm:$0xf]
    %v90 = vld [vmem:[#allocation2 + $0x44] sm:$0xf]
    %v91 = vld [vmem:[#allocation2 + $0x48] sm:$0xf]
    %v92 = vld [vmem:[#allocation2 + $0x4c] sm:$0xf]
    %v93 = vld [vmem:[%s2 + $0x1] sm:$0x1]
    %v94 = vperm.slane %v93, 0
    %v111 = vunpack.c.l.b16 %v77
    %v112 = vunpack.c.l.b16 %v78
    %v113 = vunpack.c.l.b16 %v79
    %v114 = vunpack.c.l.b16 %v80
    %v115 = vunpack.c.l.b16 %v81
    %v116 = vunpack.c.l.b16 %v82
    %v117 = vunpack.c.l.b16 %v83
    %v118 = vunpack.c.l.b16 %v84
    %v119 = vunpack.c.l.b16 %v85
    %v120 = vunpack.c.l.b16 %v86
    %v121 = vunpack.c.l.b16 %v87
    %v122 = vunpack.c.l.b16 %v88
    %v123 = vunpack.c.l.b16 %v89
    %v124 = vunpack.c.l.b16 %v90
    %v125 = vunpack.c.l.b16 %v91
    %v126 = vunpack.c.l.b16 %v92
    %v127 = vpack.c.b16 %v112, %v111
    %v128 = vpack.c.b16 %v114, %v113
    %v129 = vpack.c.b16 %v116, %v115
    %v130 = vpack.c.b16 %v118, %v117
    %v131 = vpack.c.b16 %v120, %v119
    %v132 = vpack.c.b16 %v122, %v121
    %v133 = vpack.c.b16 %v124, %v123
    %v134 = vpack.c.b16 %v126, %v125
    %143 = vmatpush.bf16.msra.mxu0 %v134
    %144 = vmatpush.bf16.msra.mxu0 %v133
    %145 = vmatpush.bf16.msra.mxu0 %v132
    %146 = vmatpush.bf16.msra.mxu0 %v131
    %147 = vmatpush.bf16.msra.mxu0 %v130
    %148 = vmatpush.bf16.msra.mxu0 %v129
    %149 = vmatpush.bf16.msra.mxu0 %v128
    %150 = vmatpush.bf16.msra.mxu0 %v127
    %151 = vmatmul.bf16.gmra.mxu0 %v76
    %v152 = vpop.f32.mrf.mxu0
    %v153 = vadd.f32 %v94, %v152
    %v154 = vpop.f32.mrf.mxu0
    %v155 = vadd.f32 %v94, %v154
    %156 = vdwg.mxu0
    %v157 = vmax.f32 %v153, 0.0
    %v158 = vmax.f32 %v155, 0.0
    %v159 = vpack.c.bf16 %v158, %v157
    %v160 = vld [vmem:[#allocation2 + $0x50] sm:$0xf]
    %v161 = vld [vmem:[#allocation2 + $0x54] sm:$0xf]
    %v162 = vld [vmem:[#allocation2 + $0x58] sm:$0xf]
    %v163 = vld [vmem:[#allocation2 + $0x5c] sm:$0xf]
    %v164 = vld [vmem:[#allocation2 + $0x60] sm:$0xf]
    %v165 = vld [vmem:[#allocation2 + $0x64] sm:$0xf]
    %v166 = vld [vmem:[#allocation2 + $0x68] sm:$0xf]
    %v167 = vld [vmem:[#allocation2 + $0x6c] sm:$0xf]
    %v168 = vld [vmem:[#allocation2 + $0x70] sm:$0xf]
    %v169 = vld [vmem:[#allocation2 + $0x74] sm:$0xf]
    %v170 = vld [vmem:[#allocation2 + $0x78] sm:$0xf]
    %v171 = vld [vmem:[#allocation2 + $0x7c] sm:$0xf]
    %v172 = vld [vmem:[#allocation2 + $0x80] sm:$0xf]
    %v173 = vld [vmem:[#allocation2 + $0x84] sm:$0xf]
    %v174 = vld [vmem:[#allocation2 + $0x88] sm:$0xf]
    %v175 = vld [vmem:[#allocation2 + $0x8c] sm:$0xf]
    %v176 = vld [vmem:[%s2 + $0x2] sm:$0x1]
    %v177 = vperm.slane %v176, 0
    %v194 = vunpack.c.l.b16 %v160
    %v195 = vunpack.c.l.b16 %v161
    %v196 = vunpack.c.l.b16 %v162
    %v197 = vunpack.c.l.b16 %v163
    %v198 = vunpack.c.l.b16 %v164
    %v199 = vunpack.c.l.b16 %v165
    %v200 = vunpack.c.l.b16 %v166
    %v201 = vunpack.c.l.b16 %v167
    %v202 = vunpack.c.l.b16 %v168
    %v203 = vunpack.c.l.b16 %v169
    %v204 = vunpack.c.l.b16 %v170
    %v205 = vunpack.c.l.b16 %v171
    %v206 = vunpack.c.l.b16 %v172
    %v207 = vunpack.c.l.b16 %v173
    %v208 = vunpack.c.l.b16 %v174
    %v209 = vunpack.c.l.b16 %v175
    %v210 = vpack.c.b16 %v195, %v194
    %v211 = vpack.c.b16 %v197, %v196
    %v212 = vpack.c.b16 %v199, %v198
    %v213 = vpack.c.b16 %v201, %v200
    %v214 = vpack.c.b16 %v203, %v202
    %v215 = vpack.c.b16 %v205, %v204
    %v216 = vpack.c.b16 %v207, %v206
    %v217 = vpack.c.b16 %v209, %v208
    %226 = vmatpush.bf16.msra.mxu0 %v217
    %227 = vmatpush.bf16.msra.mxu0 %v216
    %228 = vmatpush.bf16.msra.mxu0 %v215
    %229 = vmatpush.bf16.msra.mxu0 %v214
    %230 = vmatpush.bf16.msra.mxu0 %v213
    %231 = vmatpush.bf16.msra.mxu0 %v212
    %232 = vmatpush.bf16.msra.mxu0 %v211
    %233 = vmatpush.bf16.msra.mxu0 %v210
    %234 = vmatmul.bf16.gmra.mxu0 %v159
    %v235 = vpop.f32.mrf.mxu0
    %v236 = vadd.f32 %v177, %v235
    %v237 = vpop.f32.mrf.mxu0
    %v238 = vadd.f32 %v177, %v237
    %239 = vdwg.mxu0
    %240 = vmax.xlane.f32.xlu0 %v236
    %v241 = vpop.xlane.xlu0 %240
    %242 = vmax.xlane.f32.xlu0 %v238
    %v243 = vpop.xlane.xlu0 %242
    %v244 = vsub.f32 %v236, %v241
    %v245 = vsub.f32 %v238, %v243
    %v246 = vmul.f32 %v244, 1.442695
    %v247 = vpow.pop %v246
    %v248 = vmul.f32 %v245, 1.442695
    %v249 = vpow.pop %v248
    %250 = vadd.xlane.f32.xlu0 %v247
    %v251 = vpop.xlane.xlu0 %250
    %252 = vadd.xlane.f32.xlu0 %v249
    %v253 = vpop.xlane.xlu0 %252
    %v254 = vlog2.pop %v251
    %v255 = vmul.f32 %v254, 0.6931472
    %v256 = vlog2.pop %v253
    %v257 = vmul.f32 %v256, 0.6931472
    %v258 = vsub.f32 %v244, %v255
    %v259 = vsub.f32 %v245, %v257
    %260 = vst [vmem:[%s3] sm:$0xff] %v258
    %261 = vst [vmem:[%s3 + $0x8] sm:$0xff] %v259
    // Predicated region
    $region18: #{forward.1} parent=1 // pred_check
      _
    $region19: #{forward.1} parent=1 // pred_check_branch
      %263 = sbr.rel (0) target = $region21
    $region20: #{forward.1} parent=1 // pred_region
      _
    $region21: #{forward.1} parent=1 // pred_fallthru
      _
    // Predicated region
    $region22: #{forward.1} parent=1 // pred_check
      _
    $region23: #{forward.1} parent=1 // pred_check_branch
      %265 = sbr.rel (0) target = $region25
    $region24: #{forward.1} parent=1 // pred_region
      _
    $region25: #{forward.1} parent=1 // pred_fallthru
      _
    %266 = vsyncpa [#allocation3], 1

</llo_original>
